<compile_context>
chip_gen: v5e
topology: v5e:2x2
jax: 0.10.0
libtpu: 0.0.40
codegen_flags: <defaults>
</compile_context>

<pallas_src>
import math

import jax
import jax.numpy as jnp
from jax.experimental import pallas as pl
from jax.experimental.pallas import tpu as pltpu


# ---------------------------------------------------------------------------
# helpers
# ---------------------------------------------------------------------------
def _pick_tile(n, preferred):
    """Largest tile <= preferred that divides n (falls back to n)."""
    if n <= preferred:
        return n
    t = preferred
    while t > 8 and n % t != 0:
        t //= 2
    return t if n % t == 0 else n


def _vmem_limit(bytes_needed):
    """Only raise the scoped-VMEM limit when tiles need it; stay v7x-safe."""
    if bytes_needed <= (24 << 20):
        return None                     # compiler default is plenty
    return min(int(bytes_needed * 1.25), 56 << 20)


# ---------------------------------------------------------------------------
# Path 1: fully fused forward (all layers + skip concat) in one kernel.
# ---------------------------------------------------------------------------
def _make_fused_kernel(num_layers, compute_dtype):
    def kernel(a_ref, x_ref, *rest):
        w_refs = rest[:num_layers]
        o_ref = rest[num_layers]

        a = a_ref[...].astype(compute_dtype)
        x = x_ref[...]
        h = x
        # Static unrolled layer loop: each X @ W_i is computed exactly once.
        for w_ref in w_refs:
            xw = jnp.dot(h.astype(compute_dtype),
                         w_ref[...].astype(compute_dtype),
                         preferred_element_type=jnp.float32)
            ah = jnp.dot(a, xw.astype(compute_dtype),
                         preferred_element_type=jnp.float32)
            h = jnp.maximum(ah, 0.0)        # ReLU in f32 on the VPU
        # skip connection fused into the single output store
        o_ref[...] = jnp.concatenate(
            [h.astype(o_ref.dtype), x.astype(o_ref.dtype)], axis=1)
    return kernel


def fused_forward(A, X, w_list, compute_dtype=jnp.float32):
    N = A.shape[0]
    F_in = X.shape[1]
    F_last = w_list[-1].shape[1]
    num_layers = len(w_list)

    flops = 0
    for w in w_list:
        fi, fo = w.shape
        flops += 2 * N * fi * fo + 2 * N * N * fo
    bytes_accessed = int(4 * (A.size + X.size + sum(int(w.size) for w in w_list)
                              + N * (F_last + F_in)))

    in_specs = [pl.BlockSpec((N, N), lambda i: (0, 0)),
                pl.BlockSpec((N, F_in), lambda i: (0, 0))]
    for w in w_list:
        in_specs.append(pl.BlockSpec(tuple(w.shape), lambda i: (0, 0)))

    return pl.pallas_call(
        _make_fused_kernel(num_layers, compute_dtype),
        out_shape=jax.ShapeDtypeStruct((N, F_last + F_in), jnp.float32),
        grid_spec=pltpu.PrefetchScalarGridSpec(
            num_scalar_prefetch=0,
            grid=(1,),
            in_specs=in_specs,
            out_specs=pl.BlockSpec((N, F_last + F_in), lambda i: (0, 0)),
        ),
        compiler_params=pltpu.CompilerParams(
            dimension_semantics=("arbitrary",)),
        cost_estimate=pl.CostEstimate(
            flops=int(flops), transcendentals=0,
            bytes_accessed=bytes_accessed),
    )(A, X, *w_list)


# ---------------------------------------------------------------------------
# Path 2: large-N per-layer kernels (XW computed once, A @ XW row/K tiled).
# ---------------------------------------------------------------------------
def _make_xw_kernel(compute_dtype):
    def kernel(x_ref, w_ref, o_ref):
        o_ref[...] = jnp.dot(x_ref[...].astype(compute_dtype),
                             w_ref[...].astype(compute_dtype),
                             preferred_element_type=jnp.float32
                             ).astype(o_ref.dtype)
    return kernel


def xw_matmul(X, W, tm, compute_dtype=jnp.float32):
    """XW = X @ W, computed once per layer (row tiled, full W resident)."""
    N, F_in = X.shape
    F_out = W.shape[1]
    return pl.pallas_call(
        _make_xw_kernel(compute_dtype),
        out_shape=jax.ShapeDtypeStruct((N, F_out), compute_dtype),
        grid_spec=pltpu.PrefetchScalarGridSpec(
            num_scalar_prefetch=0,
            grid=(N // tm,),
            in_specs=[pl.BlockSpec((tm, F_in), lambda i: (i, 0)),
                      pl.BlockSpec((F_in, F_out), lambda i: (0, 0))],
            out_specs=pl.BlockSpec((tm, F_out), lambda i: (i, 0)),
        ),
        compiler_params=pltpu.CompilerParams(
            dimension_semantics=("parallel",)),
        cost_estimate=pl.CostEstimate(
            flops=int(2 * N * F_in * F_out), transcendentals=0,
            bytes_accessed=int(4 * (X.size + W.size)
                               + N * F_out * jnp.dtype(compute_dtype).itemsize)),
    )(X, W)


def _make_spmm_relu_kernel(compute_dtype):
    def kernel(a_ref, xw_ref, o_ref, acc_ref):
        k = pl.program_id(1)

        @pl.when(k == 0)
        def _init():
            acc_ref[...] = jnp.zeros_like(acc_ref)

        acc_ref[...] += jnp.dot(a_ref[...].astype(compute_dtype),
                                xw_ref[...].astype(compute_dtype),
                                preferred_element_type=jnp.float32)

        @pl.when(k == pl.num_programs(1) - 1)
        def _store():
            o_ref[...] = jnp.maximum(acc_ref[...], 0.0).astype(o_ref.dtype)
    return kernel


def spmm_relu(A, XW, tm, tk, compute_dtype=jnp.float32):
    """relu(A @ XW), row/K tiled with an f32 VMEM accumulator."""
    N = A.shape[0]
    F_out = XW.shape[1]
    xw_item = XW.dtype.itemsize
    est_vmem = 2 * (tm * tk * 4 + tk * F_out * xw_item + tm * F_out * 4) \
        + tm * F_out * 4
    return pl.pallas_call(
        _make_spmm_relu_kernel(compute_dtype),
        out_shape=jax.ShapeDtypeStruct((N, F_out), jnp.float32),
        grid_spec=pltpu.PrefetchScalarGridSpec(
            num_scalar_prefetch=0,
            grid=(N // tm, N // tk),
            in_specs=[pl.BlockSpec((tm, tk), lambda i, k: (i, k)),
                      pl.BlockSpec((tk, F_out), lambda i, k: (k, 0))],
            out_specs=pl.BlockSpec((tm, F_out), lambda i, k: (i, 0)),
            scratch_shapes=[pltpu.VMEM((tm, F_out), jnp.float32)],
        ),
        compiler_params=pltpu.CompilerParams(
            dimension_semantics=("parallel", "arbitrary"),
            vmem_limit_bytes=_vmem_limit(est_vmem)),
        cost_estimate=pl.CostEstimate(
            flops=int(2 * N * N * F_out), transcendentals=0,
            bytes_accessed=int(4 * A.size + XW.size * xw_item + 4 * N * F_out)),
    )(A, XW)


# ---------------------------------------------------------------------------
# Module forward
# ---------------------------------------------------------------------------
def sp_skip_nodefeats_gcn_forward(A_list, Nodes_list, w_list,
                                  compute_dtype=jnp.float32,
                                  force_tiled=False, tm=None, tk=None):
    node_feats = Nodes_list[-1]
    Ahat = A_list[-1]
    N = Ahat.shape[0]

    # Estimated fused-kernel working set (double-buffered inputs + temps).
    fused_bytes = 4 * (2 * int(Ahat.size) + 2 * int(node_feats.size)
                       + 2 * sum(int(w.size) for w in w_list)
                       + 4 * N * max(w.shape[1] for w in w_list)
                       + 2 * N * (w_list[-1].shape[1] + node_feats.shape[1]))

    if not force_tiled and fused_bytes < (20 << 20):
        # Whole forward (all layers + skip concat) in one kernel launch.
        return fused_forward(Ahat, node_feats, w_list, compute_dtype)

    # Large-N path: XW computed once per layer, A @ XW row/K tiled.
    tm = _pick_tile(N, 256 if tm is None else tm)
    tk = _pick_tile(N, 512 if tk is None else tk)
    h = node_feats
    for w in w_list:
        xw = xw_matmul(h, w, tm, compute_dtype)
        h = spmm_relu(Ahat, xw, tm, tk, compute_dtype)
    # skip connection: layout glue (fused in-kernel on the fused path)
    return jnp.concatenate((h, node_feats), axis=1)


# ---------------------------------------------------------------------------
# Reference, init, test harness
# ---------------------------------------------------------------------------
def reference_forward(A_list, Nodes_list, w_list):
    node_feats = Nodes_list[-1]
    Ahat = A_list[-1]
    last_l = jnp.maximum(Ahat @ (node_feats @ w_list[0]), 0.0)
    for i in range(1, len(w_list)):
        last_l = jnp.maximum(Ahat @ (last_l @ w_list[i]), 0.0)
    return jnp.concatenate((last_l, node_feats), axis=1)


def init_weights(key, feats):
    """Deterministic equivalent of u.reset_param: U(-1/sqrt(fan_out), +)."""
    ws = []
    for i in range(len(feats) - 1):
        key, sub = jax.random.split(key)
        stdv = 1.0 / math.sqrt(feats[i + 1])
        ws.append(jax.random.uniform(sub, (feats[i], feats[i + 1]),
                                     dtype=jnp.float32,
                                     minval=-stdv, maxval=stdv))
    return ws


def make_inputs(key, N, feats):
    k_a, k_x, k_w = jax.random.split(key, 3)
    A_raw = jax.random.uniform(k_a, (N, N), dtype=jnp.float32)
    A_raw = (A_raw > 0.8).astype(jnp.float32) + jnp.eye(N, dtype=jnp.float32)
    deg = jnp.sum(A_raw, axis=1, keepdims=True)
    Ahat = A_raw / deg                                   # row-normalized adj
    node_feats = jax.random.normal(k_x, (N, feats[0]), dtype=jnp.float32)
    return [Ahat], [node_feats], init_weights(k_w, feats)


if __name__ == "__main__":
    # args: feats_per_node=16, hidden_feats=[32, 32], num_hidden_layers=2
    feats = [16, 32, 32]

    # --- small graph: fully fused single-kernel path (f32) ---
    A_list, Nodes_list, w_list = make_inputs(jax.random.PRNGKey(0), 64, feats)
    out = jax.block_until_ready(
        sp_skip_nodefeats_gcn_forward(A_list, Nodes_list, w_list))
    ref = reference_forward(A_list, Nodes_list, w_list)
    assert out.shape == (64, feats[-1] + feats[0]), out.shape
    assert jnp.allclose(out, ref, atol=1e-5, rtol=1e-5), "fused f32 mismatch"

    # --- bf16 MXU inputs / f32 accumulation (v6e / v7x fast MXU path) ---
    out_bf16 = jax.block_until_ready(
        sp_skip_nodefeats_gcn_forward(A_list, Nodes_list, w_list,
                                      compute_dtype=jnp.bfloat16))
    assert jnp.allclose(out_bf16, ref, atol=5e-2, rtol=5e-2), "bf16 mismatch"

    # --- larger graph: row/K-tiled per-layer path (scalable / v7x-friendly) ---
    A_list2, Nodes_list2, w_list2 = make_inputs(jax.random.PRNGKey(1), 256, feats)
    out2 = jax.block_until_ready(
        sp_skip_nodefeats_gcn_forward(A_list2, Nodes_list2, w_list2,
                                      force_tiled=True, tm=128, tk=128))
    ref2 = reference_forward(A_list2, Nodes_list2, w_list2)
    assert out2.shape == (256, feats[-1] + feats[0]), out2.shape
    assert jnp.allclose(out2, ref2, atol=1e-4, rtol=1e-4), "tiled mismatch"

    # TODO(synk): PyTorch module takes `activation` from args; ReLU hard-coded.
    print("KERNEL_OK")
</pallas_src>

<mosaic_0001>
module attributes {stable_mosaic.version = 11 : i64} {
  func.func @kernel(%arg0: i32, %arg1: memref<64x64xf32, #tpu.memory_space<vmem>>, %arg2: memref<64x16xf32, #tpu.memory_space<vmem>>, %arg3: memref<16x32xf32, #tpu.memory_space<vmem>>, %arg4: memref<32x32xf32, #tpu.memory_space<vmem>>, %arg5: memref<64x48xf32, #tpu.memory_space<vmem>>) attributes {dimension_semantics = [#tpu.dimension_semantics<arbitrary>], iteration_bounds = array<i64: 1>, scalar_prefetch = 0 : i64, scratch_operands = 0 : i64, tpu.core_type = #tpu.core_type<tc>, window_params = [{pipeline_mode = #tpu.pipeline_mode<synchronous>, transform_indices = @transform_0, window_bounds = array<i64: 64, 64>}, {pipeline_mode = #tpu.pipeline_mode<synchronous>, transform_indices = @transform_1, window_bounds = array<i64: 64, 16>}, {pipeline_mode = #tpu.pipeline_mode<synchronous>, transform_indices = @transform_2, window_bounds = array<i64: 16, 32>}, {pipeline_mode = #tpu.pipeline_mode<synchronous>, transform_indices = @transform_3, window_bounds = array<i64: 32, 32>}, {pipeline_mode = #tpu.pipeline_mode<synchronous>, transform_indices = @transform_4, window_bounds = array<i64: 64, 48>}]} {
    %c0 = arith.constant 0 : index
    %c0_0 = arith.constant 0 : index
    %0 = vector.load %arg1[%c0, %c0_0] : memref<64x64xf32, #tpu.memory_space<vmem>>, vector<64x64xf32>
    %c0_1 = arith.constant 0 : index
    %c0_2 = arith.constant 0 : index
    %1 = vector.load %arg2[%c0_1, %c0_2] : memref<64x16xf32, #tpu.memory_space<vmem>>, vector<64x16xf32>
    %c0_3 = arith.constant 0 : index
    %c0_4 = arith.constant 0 : index
    %2 = vector.load %arg3[%c0_3, %c0_4] : memref<16x32xf32, #tpu.memory_space<vmem>>, vector<16x32xf32>
    %cst = arith.constant dense<0.000000e+00> : vector<64x32xf32>
    %3 = tpu.matmul %1, %2, %cst {dimension_numbers = #tpu.dot_dimension_numbers<[1], [0], [0], [1], [0, 0, 1, 1], [], []>} : vector<64x16xf32>, vector<16x32xf32>, vector<64x32xf32> -> vector<64x32xf32>
    %cst_5 = arith.constant dense<0.000000e+00> : vector<64x32xf32>
    %4 = tpu.matmul %0, %3, %cst_5 {dimension_numbers = #tpu.dot_dimension_numbers<[1], [0], [0], [1], [0, 0, 1, 1], [], []>} : vector<64x64xf32>, vector<64x32xf32>, vector<64x32xf32> -> vector<64x32xf32>
    %cst_6 = arith.constant 0.000000e+00 : f32
    %5 = vector.broadcast %cst_6 : f32 to vector<64x32xf32>
    %6 = arith.maximumf %4, %5 : vector<64x32xf32>
    %c0_7 = arith.constant 0 : index
    %c0_8 = arith.constant 0 : index
    %7 = vector.load %arg4[%c0_7, %c0_8] : memref<32x32xf32, #tpu.memory_space<vmem>>, vector<32x32xf32>
    %cst_9 = arith.constant dense<0.000000e+00> : vector<64x32xf32>
    %8 = tpu.matmul %6, %7, %cst_9 {dimension_numbers = #tpu.dot_dimension_numbers<[1], [0], [0], [1], [0, 0, 1, 1], [], []>} : vector<64x32xf32>, vector<32x32xf32>, vector<64x32xf32> -> vector<64x32xf32>
    %cst_10 = arith.constant dense<0.000000e+00> : vector<64x32xf32>
    %9 = tpu.matmul %0, %8, %cst_10 {dimension_numbers = #tpu.dot_dimension_numbers<[1], [0], [0], [1], [0, 0, 1, 1], [], []>} : vector<64x64xf32>, vector<64x32xf32>, vector<64x32xf32> -> vector<64x32xf32>
    %cst_11 = arith.constant 0.000000e+00 : f32
    %10 = vector.broadcast %cst_11 : f32 to vector<64x32xf32>
    %11 = arith.maximumf %9, %10 : vector<64x32xf32>
    %12 = tpu.concatenate %11, %1 in 1 : vector<64x32xf32>, vector<64x16xf32> -> vector<64x48xf32>
    %c0_12 = arith.constant 0 : index
    %c0_13 = arith.constant 0 : index
    %13 = vector.load %arg5[%c0_12, %c0_13] : memref<64x48xf32, #tpu.memory_space<vmem>>, vector<64x48xf32>
    tpu.vector_store %arg5[%c0_12, %c0_13], %12 {strides = array<i32>} : memref<64x48xf32, #tpu.memory_space<vmem>>, vector<64x48xf32>,
    return
  }
  func.func @transform_0(%arg0: i32) -> (i32, i32) {
    %c0_i32 = arith.constant 0 : i32
    %c0_i32_0 = arith.constant 0 : i32
    %c0_i32_1 = arith.constant 0 : i32
    return %c0_i32, %c0_i32_0 : i32, i32
  }
  func.func @transform_1(%arg0: i32) -> (i32, i32) {
    %c0_i32 = arith.constant 0 : i32
    %c0_i32_0 = arith.constant 0 : i32
    %c0_i32_1 = arith.constant 0 : i32
    return %c0_i32, %c0_i32_0 : i32, i32
  }
  func.func @transform_2(%arg0: i32) -> (i32, i32) {
    %c0_i32 = arith.constant 0 : i32
    %c0_i32_0 = arith.constant 0 : i32
    %c0_i32_1 = arith.constant 0 : i32
    return %c0_i32, %c0_i32_0 : i32, i32
  }
  func.func @transform_3(%arg0: i32) -> (i32, i32) {
    %c0_i32 = arith.constant 0 : i32
    %c0_i32_0 = arith.constant 0 : i32
    %c0_i32_1 = arith.constant 0 : i32
    return %c0_i32, %c0_i32_0 : i32, i32
  }
  func.func @transform_4(%arg0: i32) -> (i32, i32) {
    %c0_i32 = arith.constant 0 : i32
    %c0_i32_0 = arith.constant 0 : i32
    %c0_i32_1 = arith.constant 0 : i32
    return %c0_i32, %c0_i32_0 : i32, i32
  }
}

</mosaic_0001>

<llo_original>
// kernel: tpu_custom_call.1
$region0: #{tpu_custom_call.1}
  #allocation0 [shape = 'u32[]', space=smem, size = 0x4, offset = 0x4, fixed_abs, tag = 'smem constant byte address 0x4 - core index']
  #allocation1 [shape = 'u32[72,128]{1,0:T(1,128)}', space=vmem, size = 0x9000, scoped, tag = 'internal scratch']
  %s0 = inlined_call_operand.vmem [shape: f32[64,64], index: 0, kind: input, shape index: {}]
  %s1 = inlined_call_operand.vmem [shape: f32[64,16], index: 1, kind: input, shape index: {}]
  %s2 = inlined_call_operand.vmem [shape: f32[16,32], index: 2, kind: input, shape index: {}]
  %s3 = inlined_call_operand.hbm [shape: f32[32,32], index: 3, kind: input, shape index: {}]
  %s4 = inlined_call_operand.vmem [shape: f32[64,48], index: 4, kind: output, shape index: {}]
  %s5 = sld [smem:[#allocation0]]
  $region30: #{tpu_custom_call.1} parent=0
    _
  %s7 = ssub.s32 1, %s5
  %s8 = scalar_select 0, %s7, %s5
  $region1: #{tpu_custom_call.1} parent=0
    #allocation2 [shape = 'u8[16384]{0}', space=vmem, size = 0x4000, scoped, tag = 'input window, operand 3, single buffered']
    #allocation3 [shape = 's32[1]{0}', space=sflag, size = 0x4, scoped, tag = 'scoped memory for tpu_custom_call.1']
    %9 = vsyncpa [#allocation3], 0
    // Predicated region
    $region2: #{tpu_custom_call.1} parent=1 // pred_check
      _
    $region3: #{tpu_custom_call.1} parent=1 // pred_check_branch
      %11 = sbr.rel (0) target = $region5
    $region4: #{tpu_custom_call.1} parent=1 // pred_region
      _
    $region5: #{tpu_custom_call.1} parent=1 // pred_fallthru
      _
    // Predicated region
    $region6: #{tpu_custom_call.1} parent=1 // pred_check
      _
    $region7: #{tpu_custom_call.1} parent=1 // pred_check_branch
      %13 = sbr.rel (0) target = $region9
    $region8: #{tpu_custom_call.1} parent=1 // pred_region
      _
    $region9: #{tpu_custom_call.1} parent=1 // pred_fallthru
      _
    // Predicated region
    $region10: #{tpu_custom_call.1} parent=1 // pred_check
      _
    $region11: #{tpu_custom_call.1} parent=1 // pred_check_branch
      %15 = sbr.rel (0) target = $region13
    $region12: #{tpu_custom_call.1} parent=1 // pred_region
      _
    $region13: #{tpu_custom_call.1} parent=1 // pred_fallthru
      _
    // Predicated region
    $region14: #{tpu_custom_call.1} parent=1 // pred_check
      _
    $region15: #{tpu_custom_call.1} parent=1 // pred_check_branch
      %17 = sbr.rel (0) target = $region17
    $region16: #{tpu_custom_call.1} parent=1 // pred_region
      %19 = vsyncadd [#allocation3], 0
      %s20 = sshll.u32 %s3, 4
      %s21 = int_to_ptr.hbm [resolvable:$true] %s20
      %s22 = sshll.u32 [#allocation2], 4
      %s23 = int_to_ptr.vmem [resolvable:$true] %s22
      %28 = dma.hbm_to_vmem [thread:$0]  %s21, 512, %s23, [#allocation3], 128, 128, 8
    $region17: #{tpu_custom_call.1} parent=1 // pred_fallthru
      _
    // Predicated region
    $region18: #{tpu_custom_call.1} parent=1 // pred_check
      _
    $region19: #{tpu_custom_call.1} parent=1 // pred_check_branch
      %30 = sbr.rel (0) target = $region21
    $region20: #{tpu_custom_call.1} parent=1 // pred_region
      %32 = dma.done [#allocation3], 512
    $region21: #{tpu_custom_call.1} parent=1 // pred_fallthru
      _
    %v33 = vld [vmem:[%s0] sm:$0xff]
    %v34 = vld [vmem:[%s0 + $0x8] sm:$0xff]
    %v35 = vld [vmem:[%s0 + $0x10] sm:$0xff]
    %v36 = vld [vmem:[%s0 + $0x18] sm:$0xff]
    %v37 = vld [vmem:[%s0 + $0x20] sm:$0xff]
    %v38 = vld [vmem:[%s0 + $0x28] sm:$0xff]
    %v39 = vld [vmem:[%s0 + $0x30] sm:$0xff]
    %v40 = vld [vmem:[%s0 + $0x38] sm:$0xff]
    %v41 = vld [vmem:[%s1] sm:$0xff]
    %v42 = vld [vmem:[%s1 + $0x8] sm:$0xff]
    %v43 = vld [vmem:[%s1 + $0x10] sm:$0xff]
    %v44 = vld [vmem:[%s1 + $0x18] sm:$0xff]
    %v45 = vld [vmem:[%s1 + $0x20] sm:$0xff]
    %v46 = vld [vmem:[%s1 + $0x28] sm:$0xff]
    %v47 = vld [vmem:[%s1 + $0x30] sm:$0xff]
    %v48 = vld [vmem:[%s1 + $0x38] sm:$0xff]
    %v49 = vld [vmem:[%s2] sm:$0xff]
    %v50 = vld [vmem:[%s2 + $0x8] sm:$0xff]
    %vm51 = vcmask 130048
    %v53 = vsel %vm51, %v41, 0
    %v56 = vsel %vm51, %v42, 0
    %v59 = vsel %vm51, %v43, 0
    %v62 = vsel %vm51, %v44, 0
    %v65 = vsel %vm51, %v45, 0
    %v68 = vsel %vm51, %v46, 0
    %v71 = vsel %vm51, %v47, 0
    %v74 = vsel %vm51, %v48, 0
    %76 = vmatpush.msra.mxu0 0.0
    %77 = vmatpush.msra.mxu0 0.0
    %78 = vmatpush.msra.mxu0 0.0
    %79 = vmatpush.msra.mxu0 0.0
    %80 = vmatpush.msra.mxu0 0.0
    %81 = vmatpush.msra.mxu0 0.0
    %82 = vmatpush.msra.mxu0 0.0
    %83 = vmatpush.msra.mxu0 0.0
    %84 = vmatpush.msra.mxu0 0.0
    %85 = vmatpush.msra.mxu0 0.0
    %86 = vmatpush.msra.mxu0 0.0
    %87 = vmatpush.msra.mxu0 0.0
    %88 = vmatpush.msra.mxu0 0.0
    %89 = vmatpush.msra.mxu0 0.0
    %90 = vmatpush.msra.mxu0 %v50
    %91 = vmatpush.msra.mxu0 %v49
    %92 = vmatmul.f32.gmra.mxu0 %v53
    %v93 = vpop.f32.mrf.mxu0
    %v94 = vadd.f32 0.0, %v93
    %95 = vmatmul.f32.gmra.mxu0 %v56
    %v96 = vpop.f32.mrf.mxu0
    %v97 = vadd.f32 0.0, %v96
    %98 = vmatmul.f32.gmra.mxu0 %v59
    %v99 = vpop.f32.mrf.mxu0
    %v100 = vadd.f32 0.0, %v99
    %101 = vmatmul.f32.gmra.mxu0 %v62
    %v102 = vpop.f32.mrf.mxu0
    %v103 = vadd.f32 0.0, %v102
    %104 = vmatmul.f32.gmra.mxu0 %v65
    %v105 = vpop.f32.mrf.mxu0
    %v106 = vadd.f32 0.0, %v105
    %107 = vmatmul.f32.gmra.mxu0 %v68
    %v108 = vpop.f32.mrf.mxu0
    %v109 = vadd.f32 0.0, %v108
    %110 = vmatmul.f32.gmra.mxu0 %v71
    %v111 = vpop.f32.mrf.mxu0
    %v112 = vadd.f32 0.0, %v111
    %113 = vmatmul.f32.gmra.mxu0 %v74
    %v114 = vpop.f32.mrf.mxu0
    %v115 = vadd.f32 0.0, %v114
    %116 = vdwg.mxu0
    %vm117 = vcmask 523264
    %v119 = vsel %vm117, %v33, 0
    %v122 = vsel %vm117, %v34, 0
    %v125 = vsel %vm117, %v35, 0
    %v128 = vsel %vm117, %v36, 0
    %v131 = vsel %vm117, %v37, 0
    %v134 = vsel %vm117, %v38, 0
    %v137 = vsel %vm117, %v39, 0
    %v140 = vsel %vm117, %v40, 0
    %142 = vmatpush.msra.mxu0 0.0
    %143 = vmatpush.msra.mxu0 0.0
    %144 = vmatpush.msra.mxu0 0.0
    %145 = vmatpush.msra.mxu0 0.0
    %146 = vmatpush.msra.mxu0 0.0
    %147 = vmatpush.msra.mxu0 0.0
    %148 = vmatpush.msra.mxu0 0.0
    %149 = vmatpush.msra.mxu0 0.0
    %150 = vmatpush.msra.mxu0 %v115
    %151 = vmatpush.msra.mxu0 %v112
    %152 = vmatpush.msra.mxu0 %v109
    %153 = vmatpush.msra.mxu0 %v106
    %154 = vmatpush.msra.mxu0 %v103
    %155 = vmatpush.msra.mxu0 %v100
    %156 = vmatpush.msra.mxu0 %v97
    %157 = vmatpush.msra.mxu0 %v94
    %158 = vmatmul.f32.gmra.mxu0 %v119
    %v159 = vpop.f32.mrf.mxu0
    %v160 = vadd.f32 0.0, %v159
    %161 = vmatmul.f32.gmra.mxu0 %v122
    %v162 = vpop.f32.mrf.mxu0
    %v163 = vadd.f32 0.0, %v162
    %164 = vmatmul.f32.gmra.mxu0 %v125
    %v165 = vpop.f32.mrf.mxu0
    %v166 = vadd.f32 0.0, %v165
    %167 = vmatmul.f32.gmra.mxu0 %v128
    %v168 = vpop.f32.mrf.mxu0
    %v169 = vadd.f32 0.0, %v168
    %170 = vmatmul.f32.gmra.mxu0 %v131
    %v171 = vpop.f32.mrf.mxu0
    %v172 = vadd.f32 0.0, %v171
    %173 = vmatmul.f32.gmra.mxu0 %v134
    %v174 = vpop.f32.mrf.mxu0
    %v175 = vadd.f32 0.0, %v174
    %176 = vmatmul.f32.gmra.mxu0 %v137
    %v177 = vpop.f32.mrf.mxu0
    %v178 = vadd.f32 0.0, %v177
    %179 = vmatmul.f32.gmra.mxu0 %v140
    %v180 = vpop.f32.mrf.mxu0
    %v181 = vadd.f32 0.0, %v180
    %182 = vdwg.mxu0
    %v183 = vmax.f32 %v160, 0.0
    %v184 = vmax.f32 %v163, 0.0
    %v185 = vmax.f32 %v166, 0.0
    %v186 = vmax.f32 %v169, 0.0
    %v187 = vmax.f32 %v172, 0.0
    %v188 = vmax.f32 %v175, 0.0
    %v189 = vmax.f32 %v178, 0.0
    %v190 = vmax.f32 %v181, 0.0
    %v191 = vld [vmem:[#allocation2] sm:$0xff]
    %v192 = vld [vmem:[#allocation2 + $0x8] sm:$0xff]
    %v193 = vld [vmem:[#allocation2 + $0x10] sm:$0xff]
    %v194 = vld [vmem:[#allocation2 + $0x18] sm:$0xff]
    %vm195 = vcmask 261120
    %v197 = vsel %vm195, %v183, 0
    %v200 = vsel %vm195, %v184, 0
    %v203 = vsel %vm195, %v185, 0
    %v206 = vsel %vm195, %v186, 0
    %v209 = vsel %vm195, %v187, 0
    %v212 = vsel %vm195, %v188, 0
    %v215 = vsel %vm195, %v189, 0
    %v218 = vsel %vm195, %v190, 0
    %220 = vmatpush.msra.mxu0 0.0
    %221 = vmatpush.msra.mxu0 0.0
    %222 = vmatpush.msra.mxu0 0.0
    %223 = vmatpush.msra.mxu0 0.0
    %224 = vmatpush.msra.mxu0 0.0
    %225 = vmatpush.msra.mxu0 0.0
    %226 = vmatpush.msra.mxu0 0.0
    %227 = vmatpush.msra.mxu0 0.0
    %228 = vmatpush.msra.mxu0 0.0
    %229 = vmatpush.msra.mxu0 0.0
    %230 = vmatpush.msra.mxu0 0.0
    %231 = vmatpush.msra.mxu0 0.0
    %232 = vmatpush.msra.mxu0 %v194
    %233 = vmatpush.msra.mxu0 %v193
    %234 = vmatpush.msra.mxu0 %v192
    %235 = vmatpush.msra.mxu0 %v191
    %236 = vmatmul.f32.gmra.mxu0 %v197
    %v237 = vpop.f32.mrf.mxu0
    %v238 = vadd.f32 0.0, %v237
    %239 = vmatmul.f32.gmra.mxu0 %v200
    %v240 = vpop.f32.mrf.mxu0
    %v241 = vadd.f32 0.0, %v240
    %242 = vmatmul.f32.gmra.mxu0 %v203
    %v243 = vpop.f32.mrf.mxu0
    %v244 = vadd.f32 0.0, %v243
    %245 = vmatmul.f32.gmra.mxu0 %v206
    %v246 = vpop.f32.mrf.mxu0
    %v247 = vadd.f32 0.0, %v246
    %248 = vmatmul.f32.gmra.mxu0 %v209
    %v249 = vpop.f32.mrf.mxu0
    %v250 = vadd.f32 0.0, %v249
    %251 = vmatmul.f32.gmra.mxu0 %v212
    %v252 = vpop.f32.mrf.mxu0
    %v253 = vadd.f32 0.0, %v252
    %254 = vmatmul.f32.gmra.mxu0 %v215
    %v255 = vpop.f32.mrf.mxu0
    %v256 = vadd.f32 0.0, %v255
    %257 = vmatmul.f32.gmra.mxu0 %v218
    %v258 = vpop.f32.mrf.mxu0
    %v259 = vadd.f32 0.0, %v258
    %260 = vdwg.mxu0
    %261 = vmatpush.msra.mxu0 0.0
    %262 = vmatpush.msra.mxu0 0.0
    %263 = vmatpush.msra.mxu0 0.0
    %264 = vmatpush.msra.mxu0 0.0
    %265 = vmatpush.msra.mxu0 0.0
    %266 = vmatpush.msra.mxu0 0.0
    %267 = vmatpush.msra.mxu0 0.0
    %268 = vmatpush.msra.mxu0 0.0
    %269 = vmatpush.msra.mxu0 %v259
    %270 = vmatpush.msra.mxu0 %v256
    %271 = vmatpush.msra.mxu0 %v253
    %272 = vmatpush.msra.mxu0 %v250
    %273 = vmatpush.msra.mxu0 %v247
    %274 = vmatpush.msra.mxu0 %v244
    %275 = vmatpush.msra.mxu0 %v241
    %276 = vmatpush.msra.mxu0 %v238
    %277 = vmatmul.f32.gmra.mxu0 %v119
    %v278 = vpop.f32.mrf.mxu0
    %v279 = vadd.f32 0.0, %v278
    %280 = vmatmul.f32.gmra.mxu0 %v122
    %v281 = vpop.f32.mrf.mxu0
    %v282 = vadd.f32 0.0, %v281
    %283 = vmatmul.f32.gmra.mxu0 %v125
    %v284 = vpop.f32.mrf.mxu0
    %v285 = vadd.f32 0.0, %v284
    %286 = vmatmul.f32.gmra.mxu0 %v128
    %v287 = vpop.f32.mrf.mxu0
    %v288 = vadd.f32 0.0, %v287
    %289 = vmatmul.f32.gmra.mxu0 %v131
    %v290 = vpop.f32.mrf.mxu0
    %v291 = vadd.f32 0.0, %v290
    %292 = vmatmul.f32.gmra.mxu0 %v134
    %v293 = vpop.f32.mrf.mxu0
    %v294 = vadd.f32 0.0, %v293
    %295 = vmatmul.f32.gmra.mxu0 %v137
    %v296 = vpop.f32.mrf.mxu0
    %v297 = vadd.f32 0.0, %v296
    %298 = vmatmul.f32.gmra.mxu0 %v140
    %v299 = vpop.f32.mrf.mxu0
    %v300 = vadd.f32 0.0, %v299
    %301 = vdwg.mxu0
    %v302 = vmax.f32 %v279, 0.0
    %v303 = vmax.f32 %v282, 0.0
    %v304 = vmax.f32 %v285, 0.0
    %v305 = vmax.f32 %v288, 0.0
    %v306 = vmax.f32 %v291, 0.0
    %v307 = vmax.f32 %v294, 0.0
    %v308 = vmax.f32 %v297, 0.0
    %v309 = vmax.f32 %v300, 0.0
    %310 = vrot.lane.b32.xlu0 %v41, 32
    %v311 = vpop.permute.xlu0 %310
    %312 = vrot.lane.b32.xlu0 %v42, 32
    %v313 = vpop.permute.xlu0 %312
    %314 = vrot.lane.b32.xlu0 %v43, 32
    %v315 = vpop.permute.xlu0 %314
    %316 = vrot.lane.b32.xlu0 %v44, 32
    %v317 = vpop.permute.xlu0 %316
    %318 = vrot.lane.b32.xlu0 %v45, 32
    %v319 = vpop.permute.xlu0 %318
    %320 = vrot.lane.b32.xlu0 %v46, 32
    %v321 = vpop.permute.xlu0 %320
    %322 = vrot.lane.b32.xlu0 %v47, 32
    %v323 = vpop.permute.xlu0 %322
    %324 = vrot.lane.b32.xlu0 %v48, 32
    %v325 = vpop.permute.xlu0 %324
    %v334 = vsel %vm195, %v302, %v311
    %v335 = vsel %vm195, %v303, %v313
    %v336 = vsel %vm195, %v304, %v315
    %v337 = vsel %vm195, %v305, %v317
    %v338 = vsel %vm195, %v306, %v319
    %v339 = vsel %vm195, %v307, %v321
    %v340 = vsel %vm195, %v308, %v323
    %v341 = vsel %vm195, %v309, %v325
    %vm342 = vcmask 392192
    %343 = vst.msk [vmem:[%s4] sm:$0xff] %vm342, %v334
    %344 = vst.msk [vmem:[%s4 + $0x8] sm:$0xff] %vm342, %v335
    %345 = vst.msk [vmem:[%s4 + $0x10] sm:$0xff] %vm342, %v336
    %346 = vst.msk [vmem:[%s4 + $0x18] sm:$0xff] %vm342, %v337
    %347 = vst.msk [vmem:[%s4 + $0x20] sm:$0xff] %vm342, %v338
    %348 = vst.msk [vmem:[%s4 + $0x28] sm:$0xff] %vm342, %v339
    %349 = vst.msk [vmem:[%s4 + $0x30] sm:$0xff] %vm342, %v340
    %350 = vst.msk [vmem:[%s4 + $0x38] sm:$0xff] %vm342, %v341
    // Predicated region
    $region22: #{tpu_custom_call.1} parent=1 // pred_check
      _
    $region23: #{tpu_custom_call.1} parent=1 // pred_check_branch
      %352 = sbr.rel (0) target = $region25
    $region24: #{tpu_custom_call.1} parent=1 // pred_region
      _
    $region25: #{tpu_custom_call.1} parent=1 // pred_fallthru
      _
    // Predicated region
    $region26: #{tpu_custom_call.1} parent=1 // pred_check
      _
    $region27: #{tpu_custom_call.1} parent=1 // pred_check_branch
      %354 = sbr.rel (0) target = $region29
    $region28: #{tpu_custom_call.1} parent=1 // pred_region
      _
    $region29: #{tpu_custom_call.1} parent=1 // pred_fallthru
      _
    %355 = vsyncpa [#allocation3], 1

</llo_original>
